<compile_context>
chip_gen: v7x
topology: tpu7x:2x2x1
jax: 0.10.0
libtpu: 0.0.40
codegen_flags: <defaults>
</compile_context>

<pallas_src>
import functools
import math

import jax
import jax.numpy as jnp
import numpy as np
from jax.experimental import pallas as pl
from jax.experimental.pallas import tpu as pltpu


def roi2array(roi_size):
    if not isinstance(roi_size, np.ndarray):
        roi_size = np.array(roi_size)
    return roi_size


def _round_up(x, m):
    return ((x + m - 1) // m) * m


def _adaptive_max_pool_kernel(x_ref, o_ref, hbuf_ref, *, in_h, in_w, out_h, out_w):
    """Separable adaptive max pool on one block of channels.

    x_ref:    (TILE_B, H, W)         input block (VMEM)
    o_ref:    (TILE_B, out_h, out_w) output block (VMEM)
    hbuf_ref: (TILE_B, out_h, W)     scratch holding the H-reduced rows (VMEM)
    """
    # out_h / out_w are small compile-time constants, so the window loops are
    # statically unrolled with exact PyTorch adaptive-pool bounds:
    #   start = floor(i * H / out), end = ceil((i + 1) * H / out)
    # TODO(synk): for very large output_size (e.g. 14x14+) wrap the outer loop
    # in lax.fori_loop(..., unroll=True) to bound code size / live ranges.

    # Pass 1: adaptive H-window reductions (cheap slab maxes) -> scratch.
    for i in range(out_h):
        hs = (i * in_h) // out_h
        he = math.ceil((i + 1) * in_h / out_h)
        hbuf_ref[:, i:i + 1, :] = jnp.max(
            x_ref[:, hs:he, :], axis=1, keepdims=True)

    # Pass 2: adaptive W-window (cross-lane) reductions on the small scratch;
    # assemble the output block and store it once (short, unmasked epilogue).
    cols = []
    for j in range(out_w):
        ws = (j * in_w) // out_w
        we = math.ceil((j + 1) * in_w / out_w)
        cols.append(jnp.max(hbuf_ref[:, :, ws:we], axis=2, keepdims=True))
    o_ref[...] = jnp.concatenate(cols, axis=2)


def _vmem_budget_bytes():
    """Generation-aware VMEM sizing (v5e/v6e: 128 MiB, v7x: 64 MiB physical)."""
    try:
        cap = int(pltpu.get_tpu_info().vmem_capacity_bytes)
    except Exception:  # pragma: no cover - conservative fallback
        cap = 64 << 20
    # e.g. ~96 MiB scoped limit on v5e/v6e, ~48 MiB on v7x.
    vmem_limit = min(cap * 3 // 4, 112 << 20)
    # Leave head-room for compiler-internal scratch when sizing our buffers.
    buffer_budget = int(vmem_limit * 0.6)
    return int(vmem_limit), buffer_budget


class RoI:
    """JAX/Pallas equivalent of the PyTorch RoI module (AdaptiveMaxPool2d)."""

    def __init__(self, output_size):
        self.out_ch_last = roi2array(output_size)
        if isinstance(output_size, int):
            output_size = (output_size, output_size)
        self.output_size = tuple(int(s) for s in output_size)

    def __call__(self, x):
        # x: NCHW (PyTorch convention).
        n, c, h, w = x.shape
        out_h, out_w = self.output_size
        nc = n * c

        # Free view, no HBM relayout: NCHW -> (N*C, H, W).
        x_flat = x.reshape(nc, h, w)

        dtype_bytes = jnp.dtype(x.dtype).itemsize
        vmem_limit, buffer_budget = _vmem_budget_bytes()

        # Per-channel VMEM cost of one block: double-buffered input + output
        # plus the scratch row buffer, accounting for (8,128) tile padding.
        in_b = _round_up(h, 8) * _round_up(w, 128) * dtype_bytes
        out_b = _round_up(out_h, 8) * _round_up(out_w, 128) * dtype_bytes
        scratch_b = _round_up(out_h, 8) * _round_up(w, 128) * dtype_bytes
        per_ch = 2 * (in_b + out_b) + scratch_b

        max_tile = max(1, min(buffer_budget // per_ch, 512))
        tile_b = min(nc, max_tile)
        while nc % tile_b:  # keep the grid exact (no ragged last block)
            tile_b -= 1
        grid = (nc // tile_b,)

        kernel = functools.partial(
            _adaptive_max_pool_kernel,
            in_h=h, in_w=w, out_h=out_h, out_w=out_w)

        out_flat = pl.pallas_call(
            kernel,
            out_shape=jax.ShapeDtypeStruct((nc, out_h, out_w), x.dtype),
            grid=grid,
            in_specs=[pl.BlockSpec((tile_b, h, w), lambda b: (b, 0, 0))],
            out_specs=pl.BlockSpec((tile_b, out_h, out_w), lambda b: (b, 0, 0)),
            scratch_shapes=[pltpu.VMEM((tile_b, out_h, w), x.dtype)],
            compiler_params=pltpu.CompilerParams(
                dimension_semantics=("parallel",),
                vmem_limit_bytes=vmem_limit),
            cost_estimate=pl.CostEstimate(
                flops=h * w * nc,
                transcendentals=0,
                bytes_accessed=(h * w + out_h * out_w) * nc * dtype_bytes),
        )(x_flat)

        # Free view back to NCHW output shape.
        return out_flat.reshape(n, c, out_h, out_w)


def _reference_adaptive_max_pool(x, output_size):
    """Pure-jnp reference with identical PyTorch adaptive-pool semantics."""
    n, c, h, w = x.shape
    out_h, out_w = output_size
    rows = []
    for i in range(out_h):
        hs, he = (i * h) // out_h, math.ceil((i + 1) * h / out_h)
        cols = []
        for j in range(out_w):
            ws, we = (j * w) // out_w, math.ceil((j + 1) * w / out_w)
            cols.append(jnp.max(x[:, :, hs:he, ws:we], axis=(2, 3)))
        rows.append(jnp.stack(cols, axis=-1))
    return jnp.stack(rows, axis=-2)  # (N, C, out_h, out_w)


if __name__ == "__main__":
    key = jax.random.PRNGKey(0)

    # Case 1: small NCHW, non-divisible adaptive windows.
    x1 = jax.random.normal(key, (2, 4, 16, 16), dtype=jnp.float32)
    roi1 = RoI((5, 5))
    out1 = jax.block_until_ready(roi1(x1))
    ref1 = _reference_adaptive_max_pool(x1, (5, 5))
    assert out1.shape == (2, 4, 5, 5), out1.shape
    assert out1.dtype == x1.dtype
    np.testing.assert_allclose(np.asarray(out1), np.asarray(ref1), rtol=0, atol=0)

    # Case 2: enough channels that the N*C grid has more than one block.
    x2 = jax.random.normal(jax.random.PRNGKey(1), (2, 512, 8, 8),
                           dtype=jnp.float32)
    roi2 = RoI(3)
    out2 = jax.block_until_ready(roi2(x2))
    ref2 = _reference_adaptive_max_pool(x2, (3, 3))
    assert out2.shape == (2, 512, 3, 3), out2.shape
    np.testing.assert_allclose(np.asarray(out2), np.asarray(ref2), rtol=0, atol=0)

    print("KERNEL_OK")
</pallas_src>

<mosaic_0001>
module attributes {stable_mosaic.version = 11 : i64} {
  func.func @_adaptive_max_pool_kernel(%arg0: i32, %arg1: memref<8x16x16xf32, #tpu.memory_space<vmem>>, %arg2: memref<8x5x5xf32, #tpu.memory_space<vmem>>, %arg3: memref<8x5x16xf32, #tpu.memory_space<vmem>>) attributes {dimension_semantics = [#tpu.dimension_semantics<parallel>], iteration_bounds = array<i64: 1>, scalar_prefetch = 0 : i64, scratch_operands = 1 : i64, tpu.core_type = #tpu.core_type<tc>, window_params = [{transform_indices = @transform_0, window_bounds = array<i64: 8, 16, 16>}, {transform_indices = @transform_1, window_bounds = array<i64: 8, 5, 5>}]} {
    %c0 = arith.constant 0 : index
    %c0_0 = arith.constant 0 : index
    %c0_1 = arith.constant 0 : index
    %0 = vector.load %arg1[%c0, %c0_0, %c0_1] : memref<8x16x16xf32, #tpu.memory_space<vmem>>, vector<8x4x16xf32>
    %cst = arith.constant dense<0xFF800000> : vector<8x16xf32>
    %1 = vector.multi_reduction <maximumf>, %0, %cst [1] : vector<8x4x16xf32> to vector<8x16xf32>
    %2 = vector.shape_cast %1 : vector<8x16xf32> to vector<8x1x16xf32>
    %c0_2 = arith.constant 0 : index
    %c0_3 = arith.constant 0 : index
    %c0_4 = arith.constant 0 : index
    %3 = vector.load %arg3[%c0_2, %c0_3, %c0_4] : memref<8x5x16xf32, #tpu.memory_space<vmem>>, vector<8x1x16xf32>
    tpu.vector_store %arg3[%c0_2, %c0_3, %c0_4], %2 {strides = array<i32>} : memref<8x5x16xf32, #tpu.memory_space<vmem>>, vector<8x1x16xf32>,
    %c0_5 = arith.constant 0 : index
    %c3 = arith.constant 3 : index
    %c0_6 = arith.constant 0 : index
    %4 = vector.load %arg1[%c0_5, %c3, %c0_6] : memref<8x16x16xf32, #tpu.memory_space<vmem>>, vector<8x4x16xf32>
    %cst_7 = arith.constant dense<0xFF800000> : vector<8x16xf32>
    %5 = vector.multi_reduction <maximumf>, %4, %cst_7 [1] : vector<8x4x16xf32> to vector<8x16xf32>
    %6 = vector.shape_cast %5 : vector<8x16xf32> to vector<8x1x16xf32>
    %c0_8 = arith.constant 0 : index
    %c1 = arith.constant 1 : index
    %c0_9 = arith.constant 0 : index
    %7 = vector.load %arg3[%c0_8, %c1, %c0_9] : memref<8x5x16xf32, #tpu.memory_space<vmem>>, vector<8x1x16xf32>
    tpu.vector_store %arg3[%c0_8, %c1, %c0_9], %6 {strides = array<i32>} : memref<8x5x16xf32, #tpu.memory_space<vmem>>, vector<8x1x16xf32>,
    %c0_10 = arith.constant 0 : index
    %c6 = arith.constant 6 : index
    %c0_11 = arith.constant 0 : index
    %8 = vector.load %arg1[%c0_10, %c6, %c0_11] : memref<8x16x16xf32, #tpu.memory_space<vmem>>, vector<8x4x16xf32>
    %cst_12 = arith.constant dense<0xFF800000> : vector<8x16xf32>
    %9 = vector.multi_reduction <maximumf>, %8, %cst_12 [1] : vector<8x4x16xf32> to vector<8x16xf32>
    %10 = vector.shape_cast %9 : vector<8x16xf32> to vector<8x1x16xf32>
    %c0_13 = arith.constant 0 : index
    %c2 = arith.constant 2 : index
    %c0_14 = arith.constant 0 : index
    %11 = vector.load %arg3[%c0_13, %c2, %c0_14] : memref<8x5x16xf32, #tpu.memory_space<vmem>>, vector<8x1x16xf32>
    tpu.vector_store %arg3[%c0_13, %c2, %c0_14], %10 {strides = array<i32>} : memref<8x5x16xf32, #tpu.memory_space<vmem>>, vector<8x1x16xf32>,
    %c0_15 = arith.constant 0 : index
    %c9 = arith.constant 9 : index
    %c0_16 = arith.constant 0 : index
    %12 = vector.load %arg1[%c0_15, %c9, %c0_16] : memref<8x16x16xf32, #tpu.memory_space<vmem>>, vector<8x4x16xf32>
    %cst_17 = arith.constant dense<0xFF800000> : vector<8x16xf32>
    %13 = vector.multi_reduction <maximumf>, %12, %cst_17 [1] : vector<8x4x16xf32> to vector<8x16xf32>
    %14 = vector.shape_cast %13 : vector<8x16xf32> to vector<8x1x16xf32>
    %c0_18 = arith.constant 0 : index
    %c3_19 = arith.constant 3 : index
    %c0_20 = arith.constant 0 : index
    %15 = vector.load %arg3[%c0_18, %c3_19, %c0_20] : memref<8x5x16xf32, #tpu.memory_space<vmem>>, vector<8x1x16xf32>
    tpu.vector_store %arg3[%c0_18, %c3_19, %c0_20], %14 {strides = array<i32>} : memref<8x5x16xf32, #tpu.memory_space<vmem>>, vector<8x1x16xf32>,
    %c0_21 = arith.constant 0 : index
    %c12 = arith.constant 12 : index
    %c0_22 = arith.constant 0 : index
    %16 = vector.load %arg1[%c0_21, %c12, %c0_22] : memref<8x16x16xf32, #tpu.memory_space<vmem>>, vector<8x4x16xf32>
    %cst_23 = arith.constant dense<0xFF800000> : vector<8x16xf32>
    %17 = vector.multi_reduction <maximumf>, %16, %cst_23 [1] : vector<8x4x16xf32> to vector<8x16xf32>
    %18 = vector.shape_cast %17 : vector<8x16xf32> to vector<8x1x16xf32>
    %c0_24 = arith.constant 0 : index
    %c4 = arith.constant 4 : index
    %c0_25 = arith.constant 0 : index
    %19 = vector.load %arg3[%c0_24, %c4, %c0_25] : memref<8x5x16xf32, #tpu.memory_space<vmem>>, vector<8x1x16xf32>
    tpu.vector_store %arg3[%c0_24, %c4, %c0_25], %18 {strides = array<i32>} : memref<8x5x16xf32, #tpu.memory_space<vmem>>, vector<8x1x16xf32>,
    %c0_26 = arith.constant 0 : index
    %c0_27 = arith.constant 0 : index
    %c0_28 = arith.constant 0 : index
    %20 = vector.load %arg3[%c0_26, %c0_27, %c0_28] : memref<8x5x16xf32, #tpu.memory_space<vmem>>, vector<8x5x4xf32>
    %cst_29 = arith.constant dense<0xFF800000> : vector<8x5xf32>
    %21 = vector.multi_reduction <maximumf>, %20, %cst_29 [2] : vector<8x5x4xf32> to vector<8x5xf32>
    %22 = vector.shape_cast %21 : vector<8x5xf32> to vector<8x5x1xf32>
    %c0_30 = arith.constant 0 : index
    %c0_31 = arith.constant 0 : index
    %c3_32 = arith.constant 3 : index
    %23 = vector.load %arg3[%c0_30, %c0_31, %c3_32] : memref<8x5x16xf32, #tpu.memory_space<vmem>>, vector<8x5x4xf32>
    %cst_33 = arith.constant dense<0xFF800000> : vector<8x5xf32>
    %24 = vector.multi_reduction <maximumf>, %23, %cst_33 [2] : vector<8x5x4xf32> to vector<8x5xf32>
    %25 = vector.shape_cast %24 : vector<8x5xf32> to vector<8x5x1xf32>
    %c0_34 = arith.constant 0 : index
    %c0_35 = arith.constant 0 : index
    %c6_36 = arith.constant 6 : index
    %26 = vector.load %arg3[%c0_34, %c0_35, %c6_36] : memref<8x5x16xf32, #tpu.memory_space<vmem>>, vector<8x5x4xf32>
    %cst_37 = arith.constant dense<0xFF800000> : vector<8x5xf32>
    %27 = vector.multi_reduction <maximumf>, %26, %cst_37 [2] : vector<8x5x4xf32> to vector<8x5xf32>
    %28 = vector.shape_cast %27 : vector<8x5xf32> to vector<8x5x1xf32>
    %c0_38 = arith.constant 0 : index
    %c0_39 = arith.constant 0 : index
    %c9_40 = arith.constant 9 : index
    %29 = vector.load %arg3[%c0_38, %c0_39, %c9_40] : memref<8x5x16xf32, #tpu.memory_space<vmem>>, vector<8x5x4xf32>
    %cst_41 = arith.constant dense<0xFF800000> : vector<8x5xf32>
    %30 = vector.multi_reduction <maximumf>, %29, %cst_41 [2] : vector<8x5x4xf32> to vector<8x5xf32>
    %31 = vector.shape_cast %30 : vector<8x5xf32> to vector<8x5x1xf32>
    %c0_42 = arith.constant 0 : index
    %c0_43 = arith.constant 0 : index
    %c12_44 = arith.constant 12 : index
    %32 = vector.load %arg3[%c0_42, %c0_43, %c12_44] : memref<8x5x16xf32, #tpu.memory_space<vmem>>, vector<8x5x4xf32>
    %cst_45 = arith.constant dense<0xFF800000> : vector<8x5xf32>
    %33 = vector.multi_reduction <maximumf>, %32, %cst_45 [2] : vector<8x5x4xf32> to vector<8x5xf32>
    %34 = vector.shape_cast %33 : vector<8x5xf32> to vector<8x5x1xf32>
    %35 = tpu.concatenate %22, %25, %28, %31, %34 in 2 : vector<8x5x1xf32>, vector<8x5x1xf32>, vector<8x5x1xf32>, vector<8x5x1xf32>, vector<8x5x1xf32> -> vector<8x5x5xf32>
    %c0_46 = arith.constant 0 : index
    %c0_47 = arith.constant 0 : index
    %c0_48 = arith.constant 0 : index
    %36 = vector.load %arg2[%c0_46, %c0_47, %c0_48] : memref<8x5x5xf32, #tpu.memory_space<vmem>>, vector<8x5x5xf32>
    tpu.vector_store %arg2[%c0_46, %c0_47, %c0_48], %35 {strides = array<i32>} : memref<8x5x5xf32, #tpu.memory_space<vmem>>, vector<8x5x5xf32>,
    return
  }
  func.func @transform_0(%arg0: i32) -> (i32, i32, i32) {
    %c0_i32 = arith.constant 0 : i32
    %c0_i32_0 = arith.constant 0 : i32
    %c0_i32_1 = arith.constant 0 : i32
    return %arg0, %c0_i32, %c0_i32_0 : i32, i32, i32
  }
  func.func @transform_1(%arg0: i32) -> (i32, i32, i32) {
    %c0_i32 = arith.constant 0 : i32
    %c0_i32_0 = arith.constant 0 : i32
    %c0_i32_1 = arith.constant 0 : i32
    return %arg0, %c0_i32, %c0_i32_0 : i32, i32, i32
  }
}

</mosaic_0001>

<llo_original>
// kernel: tpu_custom_call.1
$region0: #{tpu_custom_call.1}
  #allocation0 [shape = 'u32[]', space=smem, size = 0x4, offset = 0x4, fixed_abs, tag = 'smem constant byte address 0x4 - core index']
  #allocation1 [shape = 'u32[144,128]{1,0:T(1,128)}', space=vmem, size = 0x12000, scoped, tag = 'internal scratch']
  #allocation2 [shape = 'f32[8,5,16]{2,1,0:T(8,128)}', space=vmem, size = 0x8000, scoped, tag = 'scratch operand']
  %s0 = inlined_call_operand.hbm [shape: f32[8,16,16], index: 0, kind: input, shape index: {}]
  %s1 = inlined_call_operand.vmem [shape: f32[8,5,5], index: 1, kind: output, shape index: {}]
  %s2 = sld [smem:[#allocation0]]
  $region18: #{tpu_custom_call.1} parent=0
    _
  %s4 = ssub.s32 1, %s2
  %s5 = scalar_select 0, %s4, %s2
  $region1: #{tpu_custom_call.1} parent=0
    #allocation3 [shape = 'u8[65536]{0}', space=vmem, size = 0x10000, scoped, tag = 'input window, operand 0, single buffered']
    #allocation4 [shape = 's32[1]{0}', space=sflag, size = 0x4, scoped, tag = 'scoped memory for tpu_custom_call.1']
    %6 = vsyncpa [#allocation4], 0
    // Predicated region
    $region2: #{tpu_custom_call.1} parent=1 // pred_check
      _
    $region3: #{tpu_custom_call.1} parent=1 // pred_check_branch
      %8 = sbr.rel (0) target = $region5
    $region4: #{tpu_custom_call.1} parent=1 // pred_region
      %s10 = ssub.s32 2048, 2048
      %11 = vsyncadd [#allocation4], %s10
      %s12 = sshll.u32 [#allocation3], 4
      %s13 = int_to_ptr.vmem [resolvable:$true] %s12
      %18 = dma.hbm_to_vmem [thread:$0]  %s0, 2048, %s13, [#allocation4], 128, 128, 8
    $region5: #{tpu_custom_call.1} parent=1 // pred_fallthru
      _
    // Predicated region
    $region6: #{tpu_custom_call.1} parent=1 // pred_check
      _
    $region7: #{tpu_custom_call.1} parent=1 // pred_check_branch
      %20 = sbr.rel (0) target = $region9
    $region8: #{tpu_custom_call.1} parent=1 // pred_region
      %21 = dma.done [#allocation4], 2048
    $region9: #{tpu_custom_call.1} parent=1 // pred_fallthru
      _
    %v22 = vld [vmem:[#allocation3] sm:$0xf]
    %v23 = vld [vmem:[#allocation3 + $0x10] sm:$0xf]
    %v24 = vld [vmem:[#allocation3 + $0x20] sm:$0xf]
    %v25 = vld [vmem:[#allocation3 + $0x30] sm:$0xf]
    %v26 = vld [vmem:[#allocation3 + $0x40] sm:$0xf]
    %v27 = vld [vmem:[#allocation3 + $0x50] sm:$0xf]
    %v28 = vld [vmem:[#allocation3 + $0x60] sm:$0xf]
    %v29 = vld [vmem:[#allocation3 + $0x70] sm:$0xf]
    %vm30 = vcmask 125952
    %v31 = vsel %vm30, %v22, -inf
    %v32 = vrot.slane %v31, 4
    %v33 = vmax.f32 %v31, %v32
    %v34 = vrot.slane %v33, 2
    %v35 = vmax.f32 %v33, %v34
    %v36 = vrot.slane %v35, 1
    %v37 = vmax.f32 %v35, %v36
    %v38 = vsel %vm30, %v23, -inf
    %v39 = vrot.slane %v38, 4
    %v40 = vmax.f32 %v38, %v39
    %v41 = vrot.slane %v40, 2
    %v42 = vmax.f32 %v40, %v41
    %v43 = vrot.slane %v42, 1
    %v44 = vmax.f32 %v42, %v43
    %v45 = vsel %vm30, %v24, -inf
    %v46 = vrot.slane %v45, 4
    %v47 = vmax.f32 %v45, %v46
    %v48 = vrot.slane %v47, 2
    %v49 = vmax.f32 %v47, %v48
    %v50 = vrot.slane %v49, 1
    %v51 = vmax.f32 %v49, %v50
    %v52 = vsel %vm30, %v25, -inf
    %v53 = vrot.slane %v52, 4
    %v54 = vmax.f32 %v52, %v53
    %v55 = vrot.slane %v54, 2
    %v56 = vmax.f32 %v54, %v55
    %v57 = vrot.slane %v56, 1
    %v58 = vmax.f32 %v56, %v57
    %v59 = vsel %vm30, %v26, -inf
    %v60 = vrot.slane %v59, 4
    %v61 = vmax.f32 %v59, %v60
    %v62 = vrot.slane %v61, 2
    %v63 = vmax.f32 %v61, %v62
    %v64 = vrot.slane %v63, 1
    %v65 = vmax.f32 %v63, %v64
    %v66 = vsel %vm30, %v27, -inf
    %v67 = vrot.slane %v66, 4
    %v68 = vmax.f32 %v66, %v67
    %v69 = vrot.slane %v68, 2
    %v70 = vmax.f32 %v68, %v69
    %v71 = vrot.slane %v70, 1
    %v72 = vmax.f32 %v70, %v71
    %v73 = vsel %vm30, %v28, -inf
    %v74 = vrot.slane %v73, 4
    %v75 = vmax.f32 %v73, %v74
    %v76 = vrot.slane %v75, 2
    %v77 = vmax.f32 %v75, %v76
    %v78 = vrot.slane %v77, 1
    %v79 = vmax.f32 %v77, %v78
    %v80 = vsel %vm30, %v29, -inf
    %v81 = vrot.slane %v80, 4
    %v82 = vmax.f32 %v80, %v81
    %v83 = vrot.slane %v82, 2
    %v84 = vmax.f32 %v82, %v83
    %v85 = vrot.slane %v84, 1
    %v86 = vmax.f32 %v84, %v85
    %vm87 = vcmask 122880
    %88 = vst.msk [vmem:[#allocation2] sm:$0x1] %vm87, %v37
    %89 = vst.msk [vmem:[#allocation2 + $0x8] sm:$0x1] %vm87, %v44
    %90 = vst.msk [vmem:[#allocation2 + $0x10] sm:$0x1] %vm87, %v51
    %91 = vst.msk [vmem:[#allocation2 + $0x18] sm:$0x1] %vm87, %v58
    %92 = vst.msk [vmem:[#allocation2 + $0x20] sm:$0x1] %vm87, %v65
    %93 = vst.msk [vmem:[#allocation2 + $0x28] sm:$0x1] %vm87, %v72
    %94 = vst.msk [vmem:[#allocation2 + $0x30] sm:$0x1] %vm87, %v79
    %95 = vst.msk [vmem:[#allocation2 + $0x38] sm:$0x1] %vm87, %v86
    %v96 = vld [vmem:[#allocation3 + $0x3] sm:$0xf]
    %v97 = vld [vmem:[#allocation3 + $0x13] sm:$0xf]
    %v98 = vld [vmem:[#allocation3 + $0x23] sm:$0xf]
    %v99 = vld [vmem:[#allocation3 + $0x33] sm:$0xf]
    %v100 = vld [vmem:[#allocation3 + $0x43] sm:$0xf]
    %v101 = vld [vmem:[#allocation3 + $0x53] sm:$0xf]
    %v102 = vld [vmem:[#allocation3 + $0x63] sm:$0xf]
    %v103 = vld [vmem:[#allocation3 + $0x73] sm:$0xf]
    %v104 = vsel %vm30, %v96, -inf
    %v105 = vrot.slane %v104, 4
    %v106 = vmax.f32 %v104, %v105
    %v107 = vrot.slane %v106, 2
    %v108 = vmax.f32 %v106, %v107
    %v109 = vrot.slane %v108, 1
    %v110 = vmax.f32 %v108, %v109
    %v111 = vsel %vm30, %v97, -inf
    %v112 = vrot.slane %v111, 4
    %v113 = vmax.f32 %v111, %v112
    %v114 = vrot.slane %v113, 2
    %v115 = vmax.f32 %v113, %v114
    %v116 = vrot.slane %v115, 1
    %v117 = vmax.f32 %v115, %v116
    %v118 = vsel %vm30, %v98, -inf
    %v119 = vrot.slane %v118, 4
    %v120 = vmax.f32 %v118, %v119
    %v121 = vrot.slane %v120, 2
    %v122 = vmax.f32 %v120, %v121
    %v123 = vrot.slane %v122, 1
    %v124 = vmax.f32 %v122, %v123
    %v125 = vsel %vm30, %v99, -inf
    %v126 = vrot.slane %v125, 4
    %v127 = vmax.f32 %v125, %v126
    %v128 = vrot.slane %v127, 2
    %v129 = vmax.f32 %v127, %v128
    %v130 = vrot.slane %v129, 1
    %v131 = vmax.f32 %v129, %v130
    %v132 = vsel %vm30, %v100, -inf
    %v133 = vrot.slane %v132, 4
    %v134 = vmax.f32 %v132, %v133
    %v135 = vrot.slane %v134, 2
    %v136 = vmax.f32 %v134, %v135
    %v137 = vrot.slane %v136, 1
    %v138 = vmax.f32 %v136, %v137
    %v139 = vsel %vm30, %v101, -inf
    %v140 = vrot.slane %v139, 4
    %v141 = vmax.f32 %v139, %v140
    %v142 = vrot.slane %v141, 2
    %v143 = vmax.f32 %v141, %v142
    %v144 = vrot.slane %v143, 1
    %v145 = vmax.f32 %v143, %v144
    %v146 = vsel %vm30, %v102, -inf
    %v147 = vrot.slane %v146, 4
    %v148 = vmax.f32 %v146, %v147
    %v149 = vrot.slane %v148, 2
    %v150 = vmax.f32 %v148, %v149
    %v151 = vrot.slane %v150, 1
    %v152 = vmax.f32 %v150, %v151
    %v153 = vsel %vm30, %v103, -inf
    %v154 = vrot.slane %v153, 4
    %v155 = vmax.f32 %v153, %v154
    %v156 = vrot.slane %v155, 2
    %v157 = vmax.f32 %v155, %v156
    %v158 = vrot.slane %v157, 1
    %v159 = vmax.f32 %v157, %v158
    %160 = vst.msk [vmem:[#allocation2 + $0x1] sm:$0x1] %vm87, %v110
    %161 = vst.msk [vmem:[#allocation2 + $0x9] sm:$0x1] %vm87, %v117
    %162 = vst.msk [vmem:[#allocation2 + $0x11] sm:$0x1] %vm87, %v124
    %163 = vst.msk [vmem:[#allocation2 + $0x19] sm:$0x1] %vm87, %v131
    %164 = vst.msk [vmem:[#allocation2 + $0x21] sm:$0x1] %vm87, %v138
    %165 = vst.msk [vmem:[#allocation2 + $0x29] sm:$0x1] %vm87, %v145
    %166 = vst.msk [vmem:[#allocation2 + $0x31] sm:$0x1] %vm87, %v152
    %167 = vst.msk [vmem:[#allocation2 + $0x39] sm:$0x1] %vm87, %v159
    %v168 = vld [vmem:[#allocation3 + $0x6] sm:$0xf]
    %v169 = vld [vmem:[#allocation3 + $0x16] sm:$0xf]
    %v170 = vld [vmem:[#allocation3 + $0x26] sm:$0xf]
    %v171 = vld [vmem:[#allocation3 + $0x36] sm:$0xf]
    %v172 = vld [vmem:[#allocation3 + $0x46] sm:$0xf]
    %v173 = vld [vmem:[#allocation3 + $0x56] sm:$0xf]
    %v174 = vld [vmem:[#allocation3 + $0x66] sm:$0xf]
    %v175 = vld [vmem:[#allocation3 + $0x76] sm:$0xf]
    %v176 = vsel %vm30, %v168, -inf
    %v177 = vrot.slane %v176, 4
    %v178 = vmax.f32 %v176, %v177
    %v179 = vrot.slane %v178, 2
    %v180 = vmax.f32 %v178, %v179
    %v181 = vrot.slane %v180, 1
    %v182 = vmax.f32 %v180, %v181
    %v183 = vsel %vm30, %v169, -inf
    %v184 = vrot.slane %v183, 4
    %v185 = vmax.f32 %v183, %v184
    %v186 = vrot.slane %v185, 2
    %v187 = vmax.f32 %v185, %v186
    %v188 = vrot.slane %v187, 1
    %v189 = vmax.f32 %v187, %v188
    %v190 = vsel %vm30, %v170, -inf
    %v191 = vrot.slane %v190, 4
    %v192 = vmax.f32 %v190, %v191
    %v193 = vrot.slane %v192, 2
    %v194 = vmax.f32 %v192, %v193
    %v195 = vrot.slane %v194, 1
    %v196 = vmax.f32 %v194, %v195
    %v197 = vsel %vm30, %v171, -inf
    %v198 = vrot.slane %v197, 4
    %v199 = vmax.f32 %v197, %v198
    %v200 = vrot.slane %v199, 2
    %v201 = vmax.f32 %v199, %v200
    %v202 = vrot.slane %v201, 1
    %v203 = vmax.f32 %v201, %v202
    %v204 = vsel %vm30, %v172, -inf
    %v205 = vrot.slane %v204, 4
    %v206 = vmax.f32 %v204, %v205
    %v207 = vrot.slane %v206, 2
    %v208 = vmax.f32 %v206, %v207
    %v209 = vrot.slane %v208, 1
    %v210 = vmax.f32 %v208, %v209
    %v211 = vsel %vm30, %v173, -inf
    %v212 = vrot.slane %v211, 4
    %v213 = vmax.f32 %v211, %v212
    %v214 = vrot.slane %v213, 2
    %v215 = vmax.f32 %v213, %v214
    %v216 = vrot.slane %v215, 1
    %v217 = vmax.f32 %v215, %v216
    %v218 = vsel %vm30, %v174, -inf
    %v219 = vrot.slane %v218, 4
    %v220 = vmax.f32 %v218, %v219
    %v221 = vrot.slane %v220, 2
    %v222 = vmax.f32 %v220, %v221
    %v223 = vrot.slane %v222, 1
    %v224 = vmax.f32 %v222, %v223
    %v225 = vsel %vm30, %v175, -inf
    %v226 = vrot.slane %v225, 4
    %v227 = vmax.f32 %v225, %v226
    %v228 = vrot.slane %v227, 2
    %v229 = vmax.f32 %v227, %v228
    %v230 = vrot.slane %v229, 1
    %v231 = vmax.f32 %v229, %v230
    %232 = vst.msk [vmem:[#allocation2 + $0x2] sm:$0x1] %vm87, %v182
    %233 = vst.msk [vmem:[#allocation2 + $0xa] sm:$0x1] %vm87, %v189
    %234 = vst.msk [vmem:[#allocation2 + $0x12] sm:$0x1] %vm87, %v196
    %235 = vst.msk [vmem:[#allocation2 + $0x1a] sm:$0x1] %vm87, %v203
    %236 = vst.msk [vmem:[#allocation2 + $0x22] sm:$0x1] %vm87, %v210
    %237 = vst.msk [vmem:[#allocation2 + $0x2a] sm:$0x1] %vm87, %v217
    %238 = vst.msk [vmem:[#allocation2 + $0x32] sm:$0x1] %vm87, %v224
    %239 = vst.msk [vmem:[#allocation2 + $0x3a] sm:$0x1] %vm87, %v231
    %v240 = vld [vmem:[#allocation3 + $0x9] sm:$0xf]
    %v241 = vld [vmem:[#allocation3 + $0x19] sm:$0xf]
    %v242 = vld [vmem:[#allocation3 + $0x29] sm:$0xf]
    %v243 = vld [vmem:[#allocation3 + $0x39] sm:$0xf]
    %v244 = vld [vmem:[#allocation3 + $0x49] sm:$0xf]
    %v245 = vld [vmem:[#allocation3 + $0x59] sm:$0xf]
    %v246 = vld [vmem:[#allocation3 + $0x69] sm:$0xf]
    %v247 = vld [vmem:[#allocation3 + $0x79] sm:$0xf]
    %v248 = vsel %vm30, %v240, -inf
    %v249 = vrot.slane %v248, 4
    %v250 = vmax.f32 %v248, %v249
    %v251 = vrot.slane %v250, 2
    %v252 = vmax.f32 %v250, %v251
    %v253 = vrot.slane %v252, 1
    %v254 = vmax.f32 %v252, %v253
    %v255 = vsel %vm30, %v241, -inf
    %v256 = vrot.slane %v255, 4
    %v257 = vmax.f32 %v255, %v256
    %v258 = vrot.slane %v257, 2
    %v259 = vmax.f32 %v257, %v258
    %v260 = vrot.slane %v259, 1
    %v261 = vmax.f32 %v259, %v260
    %v262 = vsel %vm30, %v242, -inf
    %v263 = vrot.slane %v262, 4
    %v264 = vmax.f32 %v262, %v263
    %v265 = vrot.slane %v264, 2
    %v266 = vmax.f32 %v264, %v265
    %v267 = vrot.slane %v266, 1
    %v268 = vmax.f32 %v266, %v267
    %v269 = vsel %vm30, %v243, -inf
    %v270 = vrot.slane %v269, 4
    %v271 = vmax.f32 %v269, %v270
    %v272 = vrot.slane %v271, 2
    %v273 = vmax.f32 %v271, %v272
    %v274 = vrot.slane %v273, 1
    %v275 = vmax.f32 %v273, %v274
    %v276 = vsel %vm30, %v244, -inf
    %v277 = vrot.slane %v276, 4
    %v278 = vmax.f32 %v276, %v277
    %v279 = vrot.slane %v278, 2
    %v280 = vmax.f32 %v278, %v279
    %v281 = vrot.slane %v280, 1
    %v282 = vmax.f32 %v280, %v281
    %v283 = vsel %vm30, %v245, -inf
    %v284 = vrot.slane %v283, 4
    %v285 = vmax.f32 %v283, %v284
    %v286 = vrot.slane %v285, 2
    %v287 = vmax.f32 %v285, %v286
    %v288 = vrot.slane %v287, 1
    %v289 = vmax.f32 %v287, %v288
    %v290 = vsel %vm30, %v246, -inf
    %v291 = vrot.slane %v290, 4
    %v292 = vmax.f32 %v290, %v291
    %v293 = vrot.slane %v292, 2
    %v294 = vmax.f32 %v292, %v293
    %v295 = vrot.slane %v294, 1
    %v296 = vmax.f32 %v294, %v295
    %v297 = vsel %vm30, %v247, -inf
    %v298 = vrot.slane %v297, 4
    %v299 = vmax.f32 %v297, %v298
    %v300 = vrot.slane %v299, 2
    %v301 = vmax.f32 %v299, %v300
    %v302 = vrot.slane %v301, 1
    %v303 = vmax.f32 %v301, %v302
    %304 = vst.msk [vmem:[#allocation2 + $0x3] sm:$0x1] %vm87, %v254
    %305 = vst.msk [vmem:[#allocation2 + $0xb] sm:$0x1] %vm87, %v261
    %306 = vst.msk [vmem:[#allocation2 + $0x13] sm:$0x1] %vm87, %v268
    %307 = vst.msk [vmem:[#allocation2 + $0x1b] sm:$0x1] %vm87, %v275
    %308 = vst.msk [vmem:[#allocation2 + $0x23] sm:$0x1] %vm87, %v282
    %309 = vst.msk [vmem:[#allocation2 + $0x2b] sm:$0x1] %vm87, %v289
    %310 = vst.msk [vmem:[#allocation2 + $0x33] sm:$0x1] %vm87, %v296
    %311 = vst.msk [vmem:[#allocation2 + $0x3b] sm:$0x1] %vm87, %v303
    %v312 = vld [vmem:[#allocation3 + $0xc] sm:$0xf]
    %v313 = vld [vmem:[#allocation3 + $0x1c] sm:$0xf]
    %v314 = vld [vmem:[#allocation3 + $0x2c] sm:$0xf]
    %v315 = vld [vmem:[#allocation3 + $0x3c] sm:$0xf]
    %v316 = vld [vmem:[#allocation3 + $0x4c] sm:$0xf]
    %v317 = vld [vmem:[#allocation3 + $0x5c] sm:$0xf]
    %v318 = vld [vmem:[#allocation3 + $0x6c] sm:$0xf]
    %v319 = vld [vmem:[#allocation3 + $0x7c] sm:$0xf]
    %v320 = vsel %vm30, %v312, -inf
    %v321 = vrot.slane %v320, 4
    %v322 = vmax.f32 %v320, %v321
    %v323 = vrot.slane %v322, 2
    %v324 = vmax.f32 %v322, %v323
    %v325 = vrot.slane %v324, 1
    %v326 = vmax.f32 %v324, %v325
    %v327 = vsel %vm30, %v313, -inf
    %v328 = vrot.slane %v327, 4
    %v329 = vmax.f32 %v327, %v328
    %v330 = vrot.slane %v329, 2
    %v331 = vmax.f32 %v329, %v330
    %v332 = vrot.slane %v331, 1
    %v333 = vmax.f32 %v331, %v332
    %v334 = vsel %vm30, %v314, -inf
    %v335 = vrot.slane %v334, 4
    %v336 = vmax.f32 %v334, %v335
    %v337 = vrot.slane %v336, 2
    %v338 = vmax.f32 %v336, %v337
    %v339 = vrot.slane %v338, 1
    %v340 = vmax.f32 %v338, %v339
    %v341 = vsel %vm30, %v315, -inf
    %v342 = vrot.slane %v341, 4
    %v343 = vmax.f32 %v341, %v342
    %v344 = vrot.slane %v343, 2
    %v345 = vmax.f32 %v343, %v344
    %v346 = vrot.slane %v345, 1
    %v347 = vmax.f32 %v345, %v346
    %v348 = vsel %vm30, %v316, -inf
    %v349 = vrot.slane %v348, 4
    %v350 = vmax.f32 %v348, %v349
    %v351 = vrot.slane %v350, 2
    %v352 = vmax.f32 %v350, %v351
    %v353 = vrot.slane %v352, 1
    %v354 = vmax.f32 %v352, %v353
    %v355 = vsel %vm30, %v317, -inf
    %v356 = vrot.slane %v355, 4
    %v357 = vmax.f32 %v355, %v356
    %v358 = vrot.slane %v357, 2
    %v359 = vmax.f32 %v357, %v358
    %v360 = vrot.slane %v359, 1
    %v361 = vmax.f32 %v359, %v360
    %v362 = vsel %vm30, %v318, -inf
    %v363 = vrot.slane %v362, 4
    %v364 = vmax.f32 %v362, %v363
    %v365 = vrot.slane %v364, 2
    %v366 = vmax.f32 %v364, %v365
    %v367 = vrot.slane %v366, 1
    %v368 = vmax.f32 %v366, %v367
    %v369 = vsel %vm30, %v319, -inf
    %v370 = vrot.slane %v369, 4
    %v371 = vmax.f32 %v369, %v370
    %v372 = vrot.slane %v371, 2
    %v373 = vmax.f32 %v371, %v372
    %v374 = vrot.slane %v373, 1
    %v375 = vmax.f32 %v373, %v374
    %376 = vst.msk [vmem:[#allocation2 + $0x4] sm:$0x1] %vm87, %v326
    %377 = vst.msk [vmem:[#allocation2 + $0xc] sm:$0x1] %vm87, %v333
    %378 = vst.msk [vmem:[#allocation2 + $0x14] sm:$0x1] %vm87, %v340
    %379 = vst.msk [vmem:[#allocation2 + $0x1c] sm:$0x1] %vm87, %v347
    %380 = vst.msk [vmem:[#allocation2 + $0x24] sm:$0x1] %vm87, %v354
    %381 = vst.msk [vmem:[#allocation2 + $0x2c] sm:$0x1] %vm87, %v361
    %382 = vst.msk [vmem:[#allocation2 + $0x34] sm:$0x1] %vm87, %v368
    %383 = vst.msk [vmem:[#allocation2 + $0x3c] sm:$0x1] %vm87, %v375
    %v384 = vld [vmem:[#allocation2] sm:$0x1f]
    %v385 = vld [vmem:[#allocation2 + $0x8] sm:$0x1f]
    %v386 = vld [vmem:[#allocation2 + $0x10] sm:$0x1f]
    %v387 = vld [vmem:[#allocation2 + $0x18] sm:$0x1f]
    %v388 = vld [vmem:[#allocation2 + $0x20] sm:$0x1f]
    %v389 = vld [vmem:[#allocation2 + $0x28] sm:$0x1f]
    %v390 = vld [vmem:[#allocation2 + $0x30] sm:$0x1f]
    %v391 = vld [vmem:[#allocation2 + $0x38] sm:$0x1f]
    %vm392 = vcmask 28672
    %v393 = vsel %vm392, %v384, -inf
    %394 = vmax.xlane.f32.xlu0 %v393
    %v395 = vpop.xlane.xlu0 %394
    %v396 = vsel %vm392, %v385, -inf
    %397 = vmax.xlane.f32.xlu0 %v396
    %v398 = vpop.xlane.xlu0 %397
    %v399 = vsel %vm392, %v386, -inf
    %400 = vmax.xlane.f32.xlu0 %v399
    %v401 = vpop.xlane.xlu0 %400
    %v402 = vsel %vm392, %v387, -inf
    %403 = vmax.xlane.f32.xlu0 %v402
    %v404 = vpop.xlane.xlu0 %403
    %v405 = vsel %vm392, %v388, -inf
    %406 = vmax.xlane.f32.xlu0 %v405
    %v407 = vpop.xlane.xlu0 %406
    %v408 = vsel %vm392, %v389, -inf
    %409 = vmax.xlane.f32.xlu0 %v408
    %v410 = vpop.xlane.xlu0 %409
    %v411 = vsel %vm392, %v390, -inf
    %412 = vmax.xlane.f32.xlu0 %v411
    %v413 = vpop.xlane.xlu0 %412
    %v414 = vsel %vm392, %v391, -inf
    %415 = vmax.xlane.f32.xlu0 %v414
    %v416 = vpop.xlane.xlu0 %415
    %vm417 = vcmask 53272
    %v418 = vsel %vm417, %v384, -inf
    %419 = vmax.xlane.f32.xlu0 %v418
    %v420 = vpop.xlane.xlu0 %419
    %v421 = vsel %vm417, %v385, -inf
    %422 = vmax.xlane.f32.xlu0 %v421
    %v423 = vpop.xlane.xlu0 %422
    %v424 = vsel %vm417, %v386, -inf
    %425 = vmax.xlane.f32.xlu0 %v424
    %v426 = vpop.xlane.xlu0 %425
    %v427 = vsel %vm417, %v387, -inf
    %428 = vmax.xlane.f32.xlu0 %v427
    %v429 = vpop.xlane.xlu0 %428
    %v430 = vsel %vm417, %v388, -inf
    %431 = vmax.xlane.f32.xlu0 %v430
    %v432 = vpop.xlane.xlu0 %431
    %v433 = vsel %vm417, %v389, -inf
    %434 = vmax.xlane.f32.xlu0 %v433
    %v435 = vpop.xlane.xlu0 %434
    %v436 = vsel %vm417, %v390, -inf
    %437 = vmax.xlane.f32.xlu0 %v436
    %v438 = vpop.xlane.xlu0 %437
    %v439 = vsel %vm417, %v391, -inf
    %440 = vmax.xlane.f32.xlu0 %v439
    %v441 = vpop.xlane.xlu0 %440
    %vm442 = vcmask 77872
    %v443 = vsel %vm442, %v384, -inf
    %444 = vmax.xlane.f32.xlu0 %v443
    %v445 = vpop.xlane.xlu0 %444
    %v446 = vsel %vm442, %v385, -inf
    %447 = vmax.xlane.f32.xlu0 %v446
    %v448 = vpop.xlane.xlu0 %447
    %v449 = vsel %vm442, %v386, -inf
    %450 = vmax.xlane.f32.xlu0 %v449
    %v451 = vpop.xlane.xlu0 %450
    %v452 = vsel %vm442, %v387, -inf
    %453 = vmax.xlane.f32.xlu0 %v452
    %v454 = vpop.xlane.xlu0 %453
    %v455 = vsel %vm442, %v388, -inf
    %456 = vmax.xlane.f32.xlu0 %v455
    %v457 = vpop.xlane.xlu0 %456
    %v458 = vsel %vm442, %v389, -inf
    %459 = vmax.xlane.f32.xlu0 %v458
    %v460 = vpop.xlane.xlu0 %459
    %v461 = vsel %vm442, %v390, -inf
    %462 = vmax.xlane.f32.xlu0 %v461
    %v463 = vpop.xlane.xlu0 %462
    %v464 = vsel %vm442, %v391, -inf
    %465 = vmax.xlane.f32.xlu0 %v464
    %v466 = vpop.xlane.xlu0 %465
    %vm467 = vcmask 102472
    %v468 = vsel %vm467, %v384, -inf
    %469 = vmax.xlane.f32.xlu0 %v468
    %v470 = vpop.xlane.xlu0 %469
    %v471 = vsel %vm467, %v385, -inf
    %472 = vmax.xlane.f32.xlu0 %v471
    %v473 = vpop.xlane.xlu0 %472
    %v474 = vsel %vm467, %v386, -inf
    %475 = vmax.xlane.f32.xlu0 %v474
    %v476 = vpop.xlane.xlu0 %475
    %v477 = vsel %vm467, %v387, -inf
    %478 = vmax.xlane.f32.xlu0 %v477
    %v479 = vpop.xlane.xlu0 %478
    %v480 = vsel %vm467, %v388, -inf
    %481 = vmax.xlane.f32.xlu0 %v480
    %v482 = vpop.xlane.xlu0 %481
    %v483 = vsel %vm467, %v389, -inf
    %484 = vmax.xlane.f32.xlu0 %v483
    %v485 = vpop.xlane.xlu0 %484
    %v486 = vsel %vm467, %v390, -inf
    %487 = vmax.xlane.f32.xlu0 %v486
    %v488 = vpop.xlane.xlu0 %487
    %v489 = vsel %vm467, %v391, -inf
    %490 = vmax.xlane.f32.xlu0 %v489
    %v491 = vpop.xlane.xlu0 %490
    %vm492 = vcmask 127072
    %v493 = vsel %vm492, %v384, -inf
    %494 = vmax.xlane.f32.xlu0 %v493
    %v495 = vpop.xlane.xlu0 %494
    %v496 = vsel %vm492, %v385, -inf
    %497 = vmax.xlane.f32.xlu0 %v496
    %v498 = vpop.xlane.xlu0 %497
    %v499 = vsel %vm492, %v386, -inf
    %500 = vmax.xlane.f32.xlu0 %v499
    %v501 = vpop.xlane.xlu0 %500
    %v502 = vsel %vm492, %v387, -inf
    %503 = vmax.xlane.f32.xlu0 %v502
    %v504 = vpop.xlane.xlu0 %503
    %v505 = vsel %vm492, %v388, -inf
    %506 = vmax.xlane.f32.xlu0 %v505
    %v507 = vpop.xlane.xlu0 %506
    %v508 = vsel %vm492, %v389, -inf
    %509 = vmax.xlane.f32.xlu0 %v508
    %v510 = vpop.xlane.xlu0 %509
    %v511 = vsel %vm492, %v390, -inf
    %512 = vmax.xlane.f32.xlu0 %v511
    %v513 = vpop.xlane.xlu0 %512
    %v514 = vsel %vm492, %v391, -inf
    %515 = vmax.xlane.f32.xlu0 %v514
    %v516 = vpop.xlane.xlu0 %515
    %vm517 = vcmask 7168
    %v518 = vsel %vm517, %v395, %v420
    %v519 = vsel %vm517, %v398, %v423
    %v520 = vsel %vm517, %v401, %v426
    %v521 = vsel %vm517, %v404, %v429
    %v522 = vsel %vm517, %v407, %v432
    %v523 = vsel %vm517, %v410, %v435
    %v524 = vsel %vm517, %v413, %v438
    %v525 = vsel %vm517, %v416, %v441
    %vm526 = vcmask 15360
    %v527 = vsel %vm526, %v518, %v445
    %v528 = vsel %vm526, %v519, %v448
    %v529 = vsel %vm526, %v520, %v451
    %v530 = vsel %vm526, %v521, %v454
    %v531 = vsel %vm526, %v522, %v457
    %v532 = vsel %vm526, %v523, %v460
    %v533 = vsel %vm526, %v524, %v463
    %v534 = vsel %vm526, %v525, %v466
    %vm535 = vcmask 23552
    %v536 = vsel %vm535, %v527, %v470
    %v537 = vsel %vm535, %v528, %v473
    %v538 = vsel %vm535, %v529, %v476
    %v539 = vsel %vm535, %v530, %v479
    %v540 = vsel %vm535, %v531, %v482
    %v541 = vsel %vm535, %v532, %v485
    %v542 = vsel %vm535, %v533, %v488
    %v543 = vsel %vm535, %v534, %v491
    %vm544 = vcmask 31744
    %v545 = vsel %vm544, %v536, %v495
    %v546 = vsel %vm544, %v537, %v498
    %v547 = vsel %vm544, %v538, %v501
    %v548 = vsel %vm544, %v539, %v504
    %v549 = vsel %vm544, %v540, %v507
    %v550 = vsel %vm544, %v541, %v510
    %v551 = vsel %vm544, %v542, %v513
    %v552 = vsel %vm544, %v543, %v516
    %vm553 = vcmask 36864
    %554 = vst.msk [vmem:[%s1] sm:$0x1f] %vm553, %v545
    %555 = vst.msk [vmem:[%s1 + $0x8] sm:$0x1f] %vm553, %v546
    %556 = vst.msk [vmem:[%s1 + $0x10] sm:$0x1f] %vm553, %v547
    %557 = vst.msk [vmem:[%s1 + $0x18] sm:$0x1f] %vm553, %v548
    %558 = vst.msk [vmem:[%s1 + $0x20] sm:$0x1f] %vm553, %v549
    %559 = vst.msk [vmem:[%s1 + $0x28] sm:$0x1f] %vm553, %v550
    %560 = vst.msk [vmem:[%s1 + $0x30] sm:$0x1f] %vm553, %v551
    %561 = vst.msk [vmem:[%s1 + $0x38] sm:$0x1f] %vm553, %v552
    // Predicated region
    $region10: #{tpu_custom_call.1} parent=1 // pred_check
      _
    $region11: #{tpu_custom_call.1} parent=1 // pred_check_branch
      %563 = sbr.rel (0) target = $region13
    $region12: #{tpu_custom_call.1} parent=1 // pred_region
      _
    $region13: #{tpu_custom_call.1} parent=1 // pred_fallthru
      _
    // Predicated region
    $region14: #{tpu_custom_call.1} parent=1 // pred_check
      _
    $region15: #{tpu_custom_call.1} parent=1 // pred_check_branch
      %565 = sbr.rel (0) target = $region17
    $region16: #{tpu_custom_call.1} parent=1 // pred_region
      _
    $region17: #{tpu_custom_call.1} parent=1 // pred_fallthru
      _
    %566 = vsyncpa [#allocation4], 1

</llo_original>
